<compile_context>
chip_gen: v7x
topology: tpu7x:2x2x1
jax: 0.10.0
libtpu: 0.0.40
codegen_flags: <defaults>
</compile_context>

<pallas_src>
import math

import jax
import jax.numpy as jnp
from jax import lax
from jax.experimental import pallas as pl
from jax.experimental.pallas import tpu as pltpu


def _round_up(a, b):
    return ((a + b - 1) // b) * b


def _make_label_smoothing_kernel(*, vocab, padding_idx, confidence, smooth_val,
                                 c_logc, s_logs, tv):
    """Returns a kernel closed over the (trace-time) scalar constants."""

    def kernel(tgt_ref, x_ref, out_ref, acc_ref):
        i = pl.program_id(0)          # row-tile index
        j = pl.program_id(1)          # vocab-tile index

        @pl.when((i == 0) & (j == 0))
        def _init():
            acc_ref[...] = jnp.zeros_like(acc_ref)

        x = x_ref[...].astype(jnp.float32)                 # (tm, tv) log-probs
        tgt = tgt_ref[...]                                 # (tm, 1) int32
        tm = x.shape[0]

        # Global vocab column index of every element in this tile.
        col = j * tv + lax.broadcasted_iota(jnp.int32, (tm, tv), 1)

        is_target = col == tgt                             # scatter of confidence
        zero = (col == padding_idx) | (tgt == padding_idx) | (col >= vocab)

        t = jnp.where(is_target, confidence, smooth_val)
        t = jnp.where(zero, 0.0, t)

        # xlogy(t, t): t only takes {0, smooth_val, confidence}; the two nonzero
        # values of t*log(t) were computed in Python at trace time.
        tlogt = jnp.where(is_target, c_logc, s_logs)
        tlogt = jnp.where(zero, 0.0, tlogt)

        # KLDivLoss(reduction='sum') with log-prob input x.
        acc_ref[...] += jnp.sum(tlogt - t * x)

        @pl.when((i == pl.num_programs(0) - 1) & (j == pl.num_programs(1) - 1))
        def _finalize():
            out_ref[...] = acc_ref[...]

    return kernel


def label_smoothing_loss(x, target, *, size, padding_idx, smoothing,
                         block_rows=256, block_vocab=2048):
    """x: (N, size) log-probabilities; target: (N,) int class ids. Returns scalar loss."""
    n, v = x.shape
    assert v == size, "x.shape[1] must equal size"
    assert size > 2, "label smoothing needs size > 2"

    confidence = 1.0 - float(smoothing)
    smooth_val = float(smoothing) / (size - 2)
    c_logc = confidence * math.log(confidence) if confidence > 0.0 else 0.0
    s_logs = smooth_val * math.log(smooth_val) if smooth_val > 0.0 else 0.0

    # Lane/sublane aligned tiles; cap at the (rounded-up) problem size.
    tm = min(block_rows, _round_up(n, 8))
    tv = min(block_vocab, _round_up(v, 128))
    n_pad = _round_up(n, tm)
    v_pad = _round_up(v, tv)

    # Pad rows with target == padding_idx -> masked to zero inside the kernel.
    x_p = jnp.pad(x, ((0, n_pad - n), (0, v_pad - v)))
    tgt_p = jnp.pad(target.astype(jnp.int32), (0, n_pad - n),
                    constant_values=int(padding_idx)).reshape(n_pad, 1)

    grid = (n_pad // tm, v_pad // tv)

    kernel = _make_label_smoothing_kernel(
        vocab=v, padding_idx=int(padding_idx), confidence=confidence,
        smooth_val=smooth_val, c_logc=c_logc, s_logs=s_logs, tv=tv)

    out = pl.pallas_call(
        kernel,
        out_shape=jax.ShapeDtypeStruct((1, 1), jnp.float32),
        grid_spec=pltpu.PrefetchScalarGridSpec(
            num_scalar_prefetch=0,
            grid=grid,
            in_specs=[
                pl.BlockSpec((tm, 1), lambda i, j: (i, 0)),    # targets
                pl.BlockSpec((tm, tv), lambda i, j: (i, j)),   # x log-probs
            ],
            out_specs=pl.BlockSpec((1, 1), lambda i, j: (0, 0)),
            scratch_shapes=[pltpu.VMEM((1, 1), jnp.float32)],
        ),
        compiler_params=pltpu.CompilerParams(
            # The single output block is resident across both grid axes
            # (scalar accumulation), so both axes are reductions.
            dimension_semantics=("arbitrary", "arbitrary")),
    )(tgt_p, x_p)

    return out[0, 0]


def _reference(x, target, size, padding_idx, smoothing):
    """Pure-JAX mirror of the PyTorch LabelSmoothing forward (eval semantics)."""
    confidence = 1.0 - smoothing
    sv = smoothing / (size - 2)
    n, v = x.shape
    td = jnp.full((n, v), sv, jnp.float32)
    td = td.at[jnp.arange(n), target].set(confidence)
    td = td.at[:, padding_idx].set(0.0)
    td = jnp.where((target == padding_idx)[:, None], 0.0, td)
    tlogt = jnp.where(td > 0, td * jnp.log(jnp.where(td > 0, td, 1.0)), 0.0)
    return jnp.sum(tlogt - td * x.astype(jnp.float32))


if __name__ == "__main__":
    key = jax.random.PRNGKey(0)
    k1, k2 = jax.random.split(key)

    size = 200           # vocab size (x.size(1) == size)
    padding_idx = 0
    smoothing = 0.1
    n_tokens = 21        # ragged on purpose: exercises row + vocab padding paths

    logits = jax.random.normal(k1, (n_tokens, size), jnp.float32)
    x = jax.nn.log_softmax(logits, axis=-1)          # KLDivLoss expects log-probs
    target = jax.random.randint(k2, (n_tokens,), 1, size, jnp.int32)
    # Force a few padding targets so the row-masking path is exercised.
    target = target.at[3].set(padding_idx).at[7].set(padding_idx)

    loss = label_smoothing_loss(x, target, size=size,
                                padding_idx=padding_idx, smoothing=smoothing)
    loss = jax.block_until_ready(loss)

    ref = _reference(x, target, size, padding_idx, smoothing)
    assert loss.shape == ()
    assert jnp.isfinite(loss)
    assert jnp.allclose(loss, ref, rtol=1e-4, atol=1e-4), (loss, ref)

    print("KERNEL_OK")
</pallas_src>

<mosaic_0001>
module attributes {stable_mosaic.version = 11 : i64} {
  func.func @kernel(%arg0: i32, %arg1: i32, %arg2: memref<24x1xi32, #tpu.memory_space<vmem>>, %arg3: memref<24x256xf32, #tpu.memory_space<vmem>>, %arg4: memref<1x1xf32, #tpu.memory_space<vmem>>, %arg5: memref<1x1xf32, #tpu.memory_space<vmem>>) attributes {dimension_semantics = [#tpu.dimension_semantics<arbitrary>, #tpu.dimension_semantics<arbitrary>], iteration_bounds = array<i64: 1, 1>, scalar_prefetch = 0 : i64, scratch_operands = 1 : i64, tpu.core_type = #tpu.core_type<tc>, window_params = [{transform_indices = @transform_0, window_bounds = array<i64: 24, 1>}, {transform_indices = @transform_1, window_bounds = array<i64: 24, 256>}, {pipeline_mode = #tpu.pipeline_mode<synchronous>, transform_indices = @transform_2, window_bounds = array<i64: 1, 1>}]} {
    %c0_i32 = arith.constant 0 : i32
    %0 = arith.cmpi eq, %arg0, %c0_i32 : i32
    %c0_i32_0 = arith.constant 0 : i32
    %1 = arith.cmpi eq, %arg1, %c0_i32_0 : i32
    %2 = arith.andi %0, %1 : i1
    %3 = arith.extui %2 : i1 to i32
    %c0_i32_1 = arith.constant 0 : i32
    %4 = arith.cmpi ne, %3, %c0_i32_1 : i32
    scf.if %4 {
      %cst_20 = arith.constant 0.000000e+00 : f32
      %47 = vector.broadcast %cst_20 : f32 to vector<1x1xf32>
      %c0_21 = arith.constant 0 : index
      %c0_22 = arith.constant 0 : index
      %48 = vector.load %arg5[%c0_21, %c0_22] : memref<1x1xf32, #tpu.memory_space<vmem>>, vector<1x1xf32>
      tpu.vector_store %arg5[%c0_21, %c0_22], %47 {strides = array<i32>} : memref<1x1xf32, #tpu.memory_space<vmem>>, vector<1x1xf32>,
    } else {
    }
    %c0 = arith.constant 0 : index
    %c0_2 = arith.constant 0 : index
    %5 = vector.load %arg3[%c0, %c0_2] : memref<24x256xf32, #tpu.memory_space<vmem>>, vector<24x256xf32>
    %c0_3 = arith.constant 0 : index
    %c0_4 = arith.constant 0 : index
    %6 = vector.load %arg2[%c0_3, %c0_4] : memref<24x1xi32, #tpu.memory_space<vmem>>, vector<24x1xi32>
    %c256_i32 = arith.constant 256 : i32
    %7 = arith.muli %arg1, %c256_i32 : i32
    %8 = tpu.iota {dimensions = array<i32: 1>} : vector<24x256xi32>
    %9 = vector.broadcast %7 : i32 to vector<24x256xi32>
    %10 = arith.addi %9, %8 : vector<24x256xi32>
    %11 = vector.broadcast %6 : vector<24x1xi32> to vector<24x256xi32>
    %12 = arith.cmpi eq, %10, %11 : vector<24x256xi32>
    %c0_i32_5 = arith.constant 0 : i32
    %13 = vector.broadcast %c0_i32_5 : i32 to vector<24x256xi32>
    %14 = arith.cmpi eq, %10, %13 : vector<24x256xi32>
    %c0_i32_6 = arith.constant 0 : i32
    %15 = vector.broadcast %c0_i32_6 : i32 to vector<24x1xi32>
    %16 = arith.cmpi eq, %6, %15 : vector<24x1xi32>
    %17 = vector.broadcast %16 : vector<24x1xi1> to vector<24x256xi1>
    %18 = arith.ori %14, %17 : vector<24x256xi1>
    %c200_i32 = arith.constant 200 : i32
    %19 = vector.broadcast %c200_i32 : i32 to vector<24x256xi32>
    %20 = arith.cmpi sge, %10, %19 : vector<24x256xi32>
    %21 = arith.ori %18, %20 : vector<24x256xi1>
    %cst = arith.constant 0.899999976 : f32
    %cst_7 = arith.constant 5.05050528E-4 : f32
    %22 = vector.broadcast %cst : f32 to vector<24x256xf32>
    %23 = vector.broadcast %cst_7 : f32 to vector<24x256xf32>
    %24 = arith.select %12, %22, %23 : vector<24x256xi1>, vector<24x256xf32>
    %cst_8 = arith.constant 0.000000e+00 : f32
    %25 = vector.broadcast %cst_8 : f32 to vector<24x256xf32>
    %26 = arith.select %21, %25, %24 : vector<24x256xi1>, vector<24x256xf32>
    %cst_9 = arith.constant -0.0948244631 : f32
    %cst_10 = arith.constant -0.00383376377 : f32
    %27 = vector.broadcast %cst_9 : f32 to vector<24x256xf32>
    %28 = vector.broadcast %cst_10 : f32 to vector<24x256xf32>
    %29 = arith.select %12, %27, %28 : vector<24x256xi1>, vector<24x256xf32>
    %cst_11 = arith.constant 0.000000e+00 : f32
    %30 = vector.broadcast %cst_11 : f32 to vector<24x256xf32>
    %31 = arith.select %21, %30, %29 : vector<24x256xi1>, vector<24x256xf32>
    %c0_12 = arith.constant 0 : index
    %c0_13 = arith.constant 0 : index
    %32 = vector.load %arg5[%c0_12, %c0_13] : memref<1x1xf32, #tpu.memory_space<vmem>>, vector<1x1xf32>
    %33 = arith.mulf %26, %5 : vector<24x256xf32>
    %34 = arith.subf %31, %33 : vector<24x256xf32>
    %35 = vector.shape_cast %34 : vector<24x256xf32> to vector<1x24x256xf32>
    %cst_14 = arith.constant dense<0.000000e+00> : vector<1xf32>
    %36 = vector.multi_reduction <add>, %35, %cst_14 [1, 2] : vector<1x24x256xf32> to vector<1xf32>
    %37 = vector.shape_cast %36 : vector<1xf32> to vector<1x1x1xf32>
    %38 = vector.extract %37[0, 0, 0] : f32 from vector<1x1x1xf32>
    %39 = vector.broadcast %38 : f32 to vector<1x1xf32>
    %40 = arith.addf %32, %39 : vector<1x1xf32>
    %c0_15 = arith.constant 0 : index
    %c0_16 = arith.constant 0 : index
    %41 = vector.load %arg5[%c0_15, %c0_16] : memref<1x1xf32, #tpu.memory_space<vmem>>, vector<1x1xf32>
    tpu.vector_store %arg5[%c0_15, %c0_16], %40 {strides = array<i32>} : memref<1x1xf32, #tpu.memory_space<vmem>>, vector<1x1xf32>,
    %c0_i32_17 = arith.constant 0 : i32
    %42 = arith.cmpi eq, %arg0, %c0_i32_17 : i32
    %c0_i32_18 = arith.constant 0 : i32
    %43 = arith.cmpi eq, %arg1, %c0_i32_18 : i32
    %44 = arith.andi %42, %43 : i1
    %45 = arith.extui %44 : i1 to i32
    %c0_i32_19 = arith.constant 0 : i32
    %46 = arith.cmpi ne, %45, %c0_i32_19 : i32
    scf.if %46 {
      %c0_20 = arith.constant 0 : index
      %c0_21 = arith.constant 0 : index
      %47 = vector.load %arg5[%c0_20, %c0_21] : memref<1x1xf32, #tpu.memory_space<vmem>>, vector<1x1xf32>
      %c0_22 = arith.constant 0 : index
      %c0_23 = arith.constant 0 : index
      %48 = vector.load %arg4[%c0_22, %c0_23] : memref<1x1xf32, #tpu.memory_space<vmem>>, vector<1x1xf32>
      tpu.vector_store %arg4[%c0_22, %c0_23], %47 {strides = array<i32>} : memref<1x1xf32, #tpu.memory_space<vmem>>, vector<1x1xf32>,
    } else {
    }
    return
  }
  func.func @transform_0(%arg0: i32, %arg1: i32) -> (i32, i32) {
    %c0_i32 = arith.constant 0 : i32
    %c0_i32_0 = arith.constant 0 : i32
    return %arg0, %c0_i32 : i32, i32
  }
  func.func @transform_1(%arg0: i32, %arg1: i32) -> (i32, i32) {
    %c0_i32 = arith.constant 0 : i32
    return %arg0, %arg1 : i32, i32
  }
  func.func @transform_2(%arg0: i32, %arg1: i32) -> (i32, i32) {
    %c0_i32 = arith.constant 0 : i32
    %c0_i32_0 = arith.constant 0 : i32
    %c0_i32_1 = arith.constant 0 : i32
    return %c0_i32, %c0_i32_0 : i32, i32
  }
}

</mosaic_0001>

<llo_original>
// kernel: tpu_custom_call.1
$region0: #{tpu_custom_call.1}
  #allocation0 [shape = 'u32[]', space=smem, size = 0x4, offset = 0x4, fixed_abs, tag = 'smem constant byte address 0x4 - core index']
  #allocation1 [shape = 'u32[144,128]{1,0:T(1,128)}', space=vmem, size = 0x12000, scoped, tag = 'internal scratch']
  #allocation2 [shape = 'f32[1,1]{1,0:T(1,128)}', space=vmem, size = 0x200, scoped, tag = 'scratch operand']
  %s0 = inlined_call_operand.vmem [shape: s32[24,1], index: 0, kind: input, shape index: {}]
  %s1 = inlined_call_operand.hbm [shape: f32[24,256], index: 1, kind: input, shape index: {}]
  %s2 = inlined_call_operand.hbm [shape: f32[1,1], index: 2, kind: output, shape index: {}]
  %s3 = sld [smem:[#allocation0]]
  $region30: #{tpu_custom_call.1} parent=0
    _
  %s5 = ssub.s32 1, %s3
  %s6 = scalar_select 0, %s5, %s3
  $region1: #{tpu_custom_call.1} parent=0
    #allocation3 [shape = 'u8[24576]{0}', space=vmem, size = 0x6000, scoped, tag = 'input window, operand 1, single buffered']
    #allocation4 [shape = 's32[1]{0}', space=sflag, size = 0x4, scoped, tag = 'scoped memory for tpu_custom_call.1']
    #allocation5 [shape = 's32[1]{0}', space=sflag, size = 0x4, scoped, tag = 'scoped memory for tpu_custom_call.1']
    #allocation6 [shape = 'u8[512]{0}', space=vmem, size = 0x400, scoped, tag = 'output window, operand 0, single buffered']
    %7 = vsyncpa [#allocation4], 0
    %8 = vsyncpa [#allocation5], 0
    // Predicated region
    $region2: #{tpu_custom_call.1} parent=1 // pred_check
      _
    $region3: #{tpu_custom_call.1} parent=1 // pred_check_branch
      %10 = sbr.rel (0) target = $region5
    $region4: #{tpu_custom_call.1} parent=1 // pred_region
      _
    $region5: #{tpu_custom_call.1} parent=1 // pred_fallthru
      _
    // Predicated region
    $region6: #{tpu_custom_call.1} parent=1 // pred_check
      _
    $region7: #{tpu_custom_call.1} parent=1 // pred_check_branch
      %12 = sbr.rel (0) target = $region9
    $region8: #{tpu_custom_call.1} parent=1 // pred_region
      %s14 = ssub.s32 768, 768
      %15 = vsyncadd [#allocation4], %s14
      %s16 = sshll.u32 [#allocation3], 4
      %s17 = int_to_ptr.vmem [resolvable:$true] %s16
      %22 = dma.hbm_to_vmem [thread:$0]  %s1, 768, %s17, [#allocation4], 256, 256, 16
    $region9: #{tpu_custom_call.1} parent=1 // pred_fallthru
      _
    // Predicated region
    $region10: #{tpu_custom_call.1} parent=1 // pred_check
      _
    $region11: #{tpu_custom_call.1} parent=1 // pred_check_branch
      %24 = sbr.rel (0) target = $region13
    $region12: #{tpu_custom_call.1} parent=1 // pred_region
      %25 = dma.done [#allocation4], 768
    $region13: #{tpu_custom_call.1} parent=1 // pred_fallthru
      _
    %p26 = scmp.eq.s32.totalorder 0, 0
    %p27 = scmp.eq.s32.totalorder 0, 0
    %p28 = pnand %p26, %p27
    %p29 = pneg %p28
    // Predicated region
    $region14: #{tpu_custom_call.1} parent=1 // pred_check
      _
    $region15: #{tpu_custom_call.1} parent=1 // pred_check_branch
      %31 = sbr.rel (%p28) target = $region17
    $region16: #{tpu_custom_call.1} parent=1 // pred_region
      %vm32 = vcmask 0
      %33 = vst.msk [vmem:[#allocation2] sm:$0x1] %vm32, 0.0
    $region17: #{tpu_custom_call.1} parent=1 // pred_fallthru
      _
    %v34 = vld [vmem:[#allocation3] sm:$0xff]
    %v35 = vld [vmem:[#allocation3 + $0x8] sm:$0xff]
    %v36 = vld [vmem:[#allocation3 + $0x10] sm:$0xff]
    %v37 = vld [vmem:[#allocation3 + $0x18] sm:$0xff]
    %v38 = vld [vmem:[#allocation3 + $0x20] sm:$0xff]
    %v39 = vld [vmem:[#allocation3 + $0x28] sm:$0xff]
    %v40 = vld [vmem:[%s0] sm:$0xff]
    %v41 = vld [vmem:[%s0 + $0x8] sm:$0xff]
    %v42 = vld [vmem:[%s0 + $0x10] sm:$0xff]
    %s43 = smul.u32 0, 256
    %v44 = vlaneseq
    %v45 = vand.u32 %v44, 127
    %v46 = vadd.s32 %v45, 128
    %v47 = vstv %s43
    %v48 = vadd.s32 %v47, %v45
    %v49 = vadd.s32 %v47, %v46
    %50 = vset.pattern.permute.xlu0 0
    %51 = vperm.xlu0 %50, %v40
    %v52 = vpop.permute.xlu0 %51
    %53 = vset.pattern.permute.xlu0 0
    %54 = vperm.xlu0 %53, %v41
    %v55 = vpop.permute.xlu0 %54
    %56 = vset.pattern.permute.xlu0 0
    %57 = vperm.xlu0 %56, %v42
    %v58 = vpop.permute.xlu0 %57
    %vm59 = vcmp.eq.s32.totalorder %v48, %v52
    %vm60 = vcmp.eq.s32.totalorder %v49, %v52
    %vm61 = vcmp.eq.s32.totalorder %v48, %v55
    %vm62 = vcmp.eq.s32.totalorder %v49, %v55
    %vm63 = vcmp.eq.s32.totalorder %v48, %v58
    %vm64 = vcmp.eq.s32.totalorder %v49, %v58
    %vm65 = vcmp.eq.s32.totalorder %v48, 0
    %vm66 = vcmp.eq.s32.totalorder %v49, 0
    %vm67 = vcmp.eq.s32.totalorder %v40, 0
    %vm68 = vcmp.eq.s32.totalorder %v41, 0
    %vm69 = vcmp.eq.s32.totalorder %v42, 0
    %v70 = vsel %vm67, 1, 0
    %v71 = vsel %vm68, 1, 0
    %v72 = vsel %vm69, 1, 0
    %73 = vset.pattern.permute.xlu0 0
    %74 = vperm.xlu0 %73, %v70
    %v75 = vpop.permute.xlu0 %74
    %76 = vset.pattern.permute.xlu0 0
    %77 = vperm.xlu0 %76, %v71
    %v78 = vpop.permute.xlu0 %77
    %79 = vset.pattern.permute.xlu0 0
    %80 = vperm.xlu0 %79, %v72
    %v81 = vpop.permute.xlu0 %80
    %vm82 = vcmp.eq.s32.totalorder %v75, 1
    %vm83 = vcmp.eq.s32.totalorder %v78, 1
    %vm84 = vcmp.eq.s32.totalorder %v81, 1
    %vm85 = vmor %vm65, %vm82
    %vm86 = vmor %vm66, %vm82
    %vm87 = vmor %vm65, %vm83
    %vm88 = vmor %vm66, %vm83
    %vm89 = vmor %vm65, %vm84
    %vm90 = vmor %vm66, %vm84
    %vm91 = vcmp.ge.s32.totalorder %v48, 200
    %vm92 = vcmp.ge.s32.totalorder %v49, 200
    %vm93 = vmor %vm85, %vm91
    %vm94 = vmor %vm86, %vm92
    %vm95 = vmor %vm87, %vm91
    %vm96 = vmor %vm88, %vm92
    %vm97 = vmor %vm89, %vm91
    %vm98 = vmor %vm90, %vm92
    %v99 = vsel %vm59, 0.9, 0.0005050505
    %v100 = vsel %vm60, 0.9, 0.0005050505
    %v101 = vsel %vm61, 0.9, 0.0005050505
    %v102 = vsel %vm62, 0.9, 0.0005050505
    %v103 = vsel %vm63, 0.9, 0.0005050505
    %v104 = vsel %vm64, 0.9, 0.0005050505
    %v105 = vsel %vm93, 0.0, %v99
    %v106 = vsel %vm94, 0.0, %v100
    %v107 = vsel %vm95, 0.0, %v101
    %v108 = vsel %vm96, 0.0, %v102
    %v109 = vsel %vm97, 0.0, %v103
    %v110 = vsel %vm98, 0.0, %v104
    %v111 = vsel %vm59, -0.09482446, -0.0038337638
    %v112 = vsel %vm60, -0.09482446, -0.0038337638
    %v113 = vsel %vm61, -0.09482446, -0.0038337638
    %v114 = vsel %vm62, -0.09482446, -0.0038337638
    %v115 = vsel %vm63, -0.09482446, -0.0038337638
    %v116 = vsel %vm64, -0.09482446, -0.0038337638
    %v117 = vsel %vm93, 0.0, %v111
    %v118 = vsel %vm94, 0.0, %v112
    %v119 = vsel %vm95, 0.0, %v113
    %v120 = vsel %vm96, 0.0, %v114
    %v121 = vsel %vm97, 0.0, %v115
    %v122 = vsel %vm98, 0.0, %v116
    %v123 = vld [vmem:[#allocation2] sm:$0x1]
    %v124 = vmul.f32 %v105, %v34
    %v125 = vmul.f32 %v106, %v35
    %v126 = vmul.f32 %v107, %v36
    %v127 = vmul.f32 %v108, %v37
    %v128 = vmul.f32 %v109, %v38
    %v129 = vmul.f32 %v110, %v39
    %v130 = vsub.f32 %v117, %v124
    %v131 = vsub.f32 %v118, %v125
    %v132 = vsub.f32 %v119, %v126
    %v133 = vsub.f32 %v120, %v127
    %v134 = vsub.f32 %v121, %v128
    %v135 = vsub.f32 %v122, %v129
    %v136 = vadd.f32 %v130, %v131
    %v137 = vadd.f32 %v136, %v132
    %v138 = vadd.f32 %v137, %v133
    %v139 = vadd.f32 %v138, %v134
    %v140 = vadd.f32 %v139, %v135
    %141 = vadd.xlane.f32.xlu0 %v140
    %v142 = vpop.xlane.xlu0 %141
    %v143 = vrot.slane %v142, 4
    %v144 = vadd.f32 %v142, %v143
    %v145 = vrot.slane %v144, 2
    %v146 = vadd.f32 %v144, %v145
    %v147 = vrot.slane %v146, 1
    %v148 = vadd.f32 %v146, %v147
    %s149 = vtos %v148
    %v150 = vstv %s149
    %v151 = vadd.f32 %v123, %v150
    %vm152 = vcmask 0
    %153 = vst.msk [vmem:[#allocation2] sm:$0x1] %vm152, %v151
    // Predicated region
    $region18: #{tpu_custom_call.1} parent=1 // pred_check
      _
    $region19: #{tpu_custom_call.1} parent=1 // pred_check_branch
      %155 = sbr.rel (%p28) target = $region21
    $region20: #{tpu_custom_call.1} parent=1 // pred_region
      %v156 = vld [vmem:[#allocation2] sm:$0x1]
      %157 = vst.msk [vmem:[#allocation6] sm:$0x1] %vm152, %v156
    $region21: #{tpu_custom_call.1} parent=1 // pred_fallthru
      _
    // Predicated region
    $region22: #{tpu_custom_call.1} parent=1 // pred_check
      _
    $region23: #{tpu_custom_call.1} parent=1 // pred_check_branch
      %159 = sbr.rel (0) target = $region25
    $region24: #{tpu_custom_call.1} parent=1 // pred_region
      %s161 = ssub.s32 16, 16
      %162 = vsyncadd [#allocation5], %s161
      %s164 = sshll.u32 [#allocation6], 4
      %s165 = int_to_ptr.vmem [resolvable:$true] %s164
      %167 = dma.vmem_to_hbm [thread:$0]  %s165, 16, %s2, [#allocation5]
    $region25: #{tpu_custom_call.1} parent=1 // pred_fallthru
      _
    // Predicated region
    $region26: #{tpu_custom_call.1} parent=1 // pred_check
      _
    $region27: #{tpu_custom_call.1} parent=1 // pred_check_branch
      %169 = sbr.rel (0) target = $region29
    $region28: #{tpu_custom_call.1} parent=1 // pred_region
      %170 = dma.done [#allocation5], 16
    $region29: #{tpu_custom_call.1} parent=1 // pred_fallthru
      _
    %171 = vsyncpa [#allocation4], 1
    %172 = vsyncpa [#allocation5], 1

</llo_original>
